<compile_context>
chip_gen: v7x
topology: tpu7x:2x2x1
jax: 0.10.0
libtpu: 0.0.40
codegen_flags: <defaults>
</compile_context>

<pallas_src>
import math

import jax
import jax.numpy as jnp
from jax import lax
from jax.experimental import pallas as pl
from jax.experimental.pallas import tpu as pltpu


def _round_up(x, m):
    return (x + m - 1) // m * m


def _make_kernel(n_strips, strip_words, W, E, K, P, KE, Fp, unroll):
    rows = strip_words * W

    def kernel(e_ref, w_ref, b_ref, o_ref, patch_ref):
        # e_ref:     (tn, W, E)            bf16  gathered char embeddings
        # w_ref:     (KE, Fp)              bf16  conv weights, row index = k*E + e
        # b_ref:     (1, Fp)               f32   conv bias (lane padded)
        # o_ref:     (tn, Fp)              bf16  per-word max-pooled features
        # patch_ref: (strip_words, W, KE)  bf16  VMEM scratch (im2col strip)

        # Zero the scratch every grid step (a handful of vector stores).  The
        # halo positions of each tap are never overwritten below, so they must
        # be zero; doing it unconditionally keeps megacore partitioning safe.
        patch_ref[...] = jnp.zeros_like(patch_ref)

        w = w_ref[...]
        # Pre-broadcast the bias once, outside the strip loop (no per-iter
        # broadcast_in_dim).
        b = jnp.broadcast_to(b_ref[...], (strip_words, Fp))

        def strip(s, carry):
            r0 = pl.multiple_of(s * strip_words, strip_words)
            e = e_ref[pl.ds(r0, strip_words), :, :]              # (sw, W, E) bf16
            # --- in-kernel im2col: write the K taps into the patch scratch ---
            for k in range(K):                                   # static, K small
                d = k - P                                        # char shift
                lo, hi = max(0, -d), min(W, W - d)               # valid out chars
                patch_ref[:, lo:hi, k * E:(k + 1) * E] = e[:, lo + d:hi + d, :]
            x = patch_ref[...].reshape(rows, KE)                 # (rows, KE) bf16
            # --- single full-depth MXU matmul, f32 accumulation --------------
            y = jnp.dot(x, w, preferred_element_type=jnp.float32)    # (rows, Fp)
            m = jnp.max(y.reshape(strip_words, W, Fp), axis=1)       # (sw, Fp)
            # bias + ReLU after the max (exact: ReLU monotone, bias const over W)
            o_ref[pl.ds(r0, strip_words), :] = (
                jnp.maximum(m + b, 0.0).astype(o_ref.dtype))
            return carry

        lax.fori_loop(0, n_strips, strip, 0, unroll=unroll)

    return kernel


def character_embedding_forward(x_idx, emb_table, conv_w, conv_b, *,
                                kernel_size=5, padding=2, tn=2048,
                                out_dtype=jnp.bfloat16):
    """Pallas implementation of CharacterEmbedding.forward (eval mode).

    Returns (B, S, n_filters) in `out_dtype` (bf16 by default; matmul operands
    are bf16, accumulation and epilogue are f32).
    """
    B, S, W = x_idx.shape
    V, E = emb_table.shape
    F_out = conv_w.shape[0]
    K, P = kernel_size, padding
    N = B * S
    KE = K * E
    Fp = _round_up(F_out, 128)             # lane-dense output width

    # Word tile: as large as possible (amortize per-step overhead), but keep at
    # least 2 grid steps when N allows so v7x's two TensorCores both get work.
    n_steps = max(1, math.ceil(N / tn))
    if n_steps == 1 and N > 8:
        n_steps = 2
    tn_eff = _round_up(math.ceil(N / n_steps), 8)
    NP = tn_eff * n_steps

    # Strip size: ~128 MXU rows per strip (keeps the live f32 result in vregs);
    # must divide the word tile.
    target_words = max(1, 128 // W)
    strip_words = max(d for d in range(1, tn_eff + 1)
                      if tn_eff % d == 0 and d <= target_words)
    n_strips = tn_eff // strip_words
    unroll = 2 if n_strips % 2 == 0 else 1

    # ---- XLA-side glue: embedding gather ONLY (no pad / stack / im2col) ------
    emb = emb_table.astype(jnp.bfloat16)[x_idx.reshape(N, W)]          # (N, W, E)
    if NP != N:
        emb = jnp.pad(emb, ((0, NP - N), (0, 0), (0, 0)))

    # conv weight (F, E, 1, K) -> rows k*E + e, cols f ; zero-pad filters to Fp.
    w_mat = jnp.transpose(conv_w[:, :, 0, :], (2, 1, 0)).reshape(KE, F_out)
    w_mat = jnp.pad(w_mat, ((0, 0), (0, Fp - F_out))).astype(jnp.bfloat16)
    b_mat = jnp.pad(conv_b, (0, Fp - F_out)).reshape(1, Fp).astype(jnp.float32)

    kernel = _make_kernel(n_strips, strip_words, W, E, K, P, KE, Fp, unroll)

    out = pl.pallas_call(
        kernel,
        out_shape=jax.ShapeDtypeStruct((NP, Fp), out_dtype),
        grid_spec=pltpu.PrefetchScalarGridSpec(
            num_scalar_prefetch=0,
            grid=(n_steps,),
            in_specs=[
                pl.BlockSpec((tn_eff, W, E), lambda i: (i, 0, 0)),
                pl.BlockSpec((KE, Fp), lambda i: (0, 0)),
                pl.BlockSpec((1, Fp), lambda i: (0, 0)),
            ],
            out_specs=pl.BlockSpec((tn_eff, Fp), lambda i: (i, 0)),
            scratch_shapes=[pltpu.VMEM((strip_words, W, KE), jnp.bfloat16)],
        ),
        compiler_params=pltpu.CompilerParams(
            dimension_semantics=("parallel",)),
    )(emb, w_mat, b_mat)

    # TODO(synk): downstream consumers could take the lane-padded (NP, Fp) slab
    # directly and skip this slice (saves one read+write of the output).
    return out[:N, :F_out].reshape(B, S, F_out)


def reference_forward(x_idx, emb_table, conv_w, conv_b, *, kernel_size=5, padding=2):
    """Pure-JAX reference matching the PyTorch forward (eval mode, bf16 operands)."""
    B, S, W = x_idx.shape
    K, P = kernel_size, padding
    emb = emb_table.astype(jnp.bfloat16)[x_idx]                        # (B, S, W, E)
    emb_p = jnp.pad(emb, ((0, 0), (0, 0), (P, P), (0, 0)))             # (B, S, Wp, E)
    w = conv_w.astype(jnp.bfloat16)
    acc = jnp.zeros((B, S, W, conv_w.shape[0]), jnp.float32)
    for k in range(K):
        acc = acc + jnp.einsum('bswe,fe->bswf', emb_p[:, :, k:k + W, :],
                               w[:, :, 0, k],
                               preferred_element_type=jnp.float32)
    y = acc + conv_b[None, None, None, :].astype(jnp.float32)
    y = jnp.maximum(y, 0.0)                                            # PyTorch order
    return jnp.max(y, axis=2)                                          # (B, S, F)


if __name__ == "__main__":
    # Small shapes consistent with the module defaults.
    B, S, W = 2, 8, 16           # batch, words per example, chars per word
    V, E = 64, 32                # num_embeddings, embedding_dim
    F_out, K, P = 200, 5, 2      # n_filters, kernel_size, padding

    key = jax.random.PRNGKey(0)
    k1, k2, k3, k4 = jax.random.split(key, 4)
    emb_table = jax.random.normal(k1, (V, E), jnp.float32)
    conv_w = jax.random.normal(k2, (F_out, E, 1, K), jnp.float32) * 0.1
    conv_b = jax.random.normal(k3, (F_out,), jnp.float32) * 0.1
    x_idx = jax.random.randint(k4, (B, S, W), 0, V, jnp.int32)

    out = character_embedding_forward(x_idx, emb_table, conv_w, conv_b,
                                      kernel_size=K, padding=P)
    out = jax.block_until_ready(out)

    ref = reference_forward(x_idx, emb_table, conv_w, conv_b,
                            kernel_size=K, padding=P)
    assert out.shape == (B, S, F_out), out.shape
    err = float(jnp.max(jnp.abs(out.astype(jnp.float32) - ref)))
    assert jnp.allclose(out.astype(jnp.float32), ref, rtol=2e-2, atol=2e-2), err

    print("KERNEL_OK")
</pallas_src>

<mosaic_0001>
module attributes {stable_mosaic.version = 11 : i64} {
  func.func @kernel(%arg0: i32, %arg1: memref<8x16x32xbf16, #tpu.memory_space<vmem>>, %arg2: memref<160x256xbf16, #tpu.memory_space<vmem>>, %arg3: memref<1x256xf32, #tpu.memory_space<vmem>>, %arg4: memref<8x256xbf16, #tpu.memory_space<vmem>>, %arg5: memref<8x16x160xbf16, #tpu.memory_space<vmem>>) attributes {dimension_semantics = [#tpu.dimension_semantics<parallel>], iteration_bounds = array<i64: 2>, scalar_prefetch = 0 : i64, scratch_operands = 1 : i64, tpu.core_type = #tpu.core_type<tc>, window_params = [{transform_indices = @transform_0, window_bounds = array<i64: 8, 16, 32>}, {pipeline_mode = #tpu.pipeline_mode<synchronous>, transform_indices = @transform_1, window_bounds = array<i64: 160, 256>}, {pipeline_mode = #tpu.pipeline_mode<synchronous>, transform_indices = @transform_2, window_bounds = array<i64: 1, 256>}, {transform_indices = @transform_3, window_bounds = array<i64: 8, 256>}]} {
    %cst = arith.constant 0.000000e+00 : bf16
    %0 = vector.broadcast %cst : bf16 to vector<8x16x160xbf16>
    %c0 = arith.constant 0 : index
    %c0_0 = arith.constant 0 : index
    %c0_1 = arith.constant 0 : index
    %1 = vector.load %arg5[%c0, %c0_0, %c0_1] : memref<8x16x160xbf16, #tpu.memory_space<vmem>>, vector<8x16x160xbf16>
    tpu.vector_store %arg5[%c0, %c0_0, %c0_1], %0 {strides = array<i32>} : memref<8x16x160xbf16, #tpu.memory_space<vmem>>, vector<8x16x160xbf16>,
    %c0_2 = arith.constant 0 : index
    %c0_3 = arith.constant 0 : index
    %2 = vector.load %arg2[%c0_2, %c0_3] : memref<160x256xbf16, #tpu.memory_space<vmem>>, vector<160x256xbf16>
    %c0_4 = arith.constant 0 : index
    %c0_5 = arith.constant 0 : index
    %3 = vector.load %arg3[%c0_4, %c0_5] : memref<1x256xf32, #tpu.memory_space<vmem>>, vector<1x256xf32>
    %4 = vector.shape_cast %3 : vector<1x256xf32> to vector<1x256xf32>
    %5 = vector.broadcast %4 : vector<1x256xf32> to vector<8x256xf32>
    %c0_i32 = arith.constant 0 : i32
    %c8_i32 = arith.constant 8 : i32
    %6 = arith.muli %c0_i32, %c8_i32 : i32
    %7 = tpu.assume_multiple %6, 8 : i32
    %8 = arith.index_cast %7 : i32 to index
    %c0_6 = arith.constant 0 : index
    %c0_7 = arith.constant 0 : index
    %9 = vector.load %arg1[%8, %c0_6, %c0_7] : memref<8x16x32xbf16, #tpu.memory_space<vmem>>, vector<8x16x32xbf16>
    %10 = vector.extract_strided_slice %9 {offsets = [0, 0, 0], sizes = [8, 14, 32], strides = [1, 1, 1]} : vector<8x16x32xbf16> to vector<8x14x32xbf16>
    %c0_8 = arith.constant 0 : index
    %c2 = arith.constant 2 : index
    %c0_9 = arith.constant 0 : index
    %11 = vector.load %arg5[%c0_8, %c2, %c0_9] : memref<8x16x160xbf16, #tpu.memory_space<vmem>>, vector<8x14x32xbf16>
    tpu.vector_store %arg5[%c0_8, %c2, %c0_9], %10 {strides = array<i32>} : memref<8x16x160xbf16, #tpu.memory_space<vmem>>, vector<8x14x32xbf16>,
    %12 = vector.extract_strided_slice %9 {offsets = [0, 0, 0], sizes = [8, 15, 32], strides = [1, 1, 1]} : vector<8x16x32xbf16> to vector<8x15x32xbf16>
    %c0_10 = arith.constant 0 : index
    %c1 = arith.constant 1 : index
    %c32 = arith.constant 32 : index
    %13 = vector.load %arg5[%c0_10, %c1, %c32] : memref<8x16x160xbf16, #tpu.memory_space<vmem>>, vector<8x15x32xbf16>
    tpu.vector_store %arg5[%c0_10, %c1, %c32], %12 {strides = array<i32>} : memref<8x16x160xbf16, #tpu.memory_space<vmem>>, vector<8x15x32xbf16>,
    %c0_11 = arith.constant 0 : index
    %c0_12 = arith.constant 0 : index
    %c64 = arith.constant 64 : index
    %14 = vector.load %arg5[%c0_11, %c0_12, %c64] : memref<8x16x160xbf16, #tpu.memory_space<vmem>>, vector<8x16x32xbf16>
    tpu.vector_store %arg5[%c0_11, %c0_12, %c64], %9 {strides = array<i32>} : memref<8x16x160xbf16, #tpu.memory_space<vmem>>, vector<8x16x32xbf16>,
    %15 = vector.extract_strided_slice %9 {offsets = [0, 1, 0], sizes = [8, 15, 32], strides = [1, 1, 1]} : vector<8x16x32xbf16> to vector<8x15x32xbf16>
    %c0_13 = arith.constant 0 : index
    %c0_14 = arith.constant 0 : index
    %c96 = arith.constant 96 : index
    %16 = vector.load %arg5[%c0_13, %c0_14, %c96] : memref<8x16x160xbf16, #tpu.memory_space<vmem>>, vector<8x15x32xbf16>
    tpu.vector_store %arg5[%c0_13, %c0_14, %c96], %15 {strides = array<i32>} : memref<8x16x160xbf16, #tpu.memory_space<vmem>>, vector<8x15x32xbf16>,
    %17 = vector.extract_strided_slice %9 {offsets = [0, 2, 0], sizes = [8, 14, 32], strides = [1, 1, 1]} : vector<8x16x32xbf16> to vector<8x14x32xbf16>
    %c0_15 = arith.constant 0 : index
    %c0_16 = arith.constant 0 : index
    %c128 = arith.constant 128 : index
    %18 = vector.load %arg5[%c0_15, %c0_16, %c128] : memref<8x16x160xbf16, #tpu.memory_space<vmem>>, vector<8x14x32xbf16>
    tpu.vector_store %arg5[%c0_15, %c0_16, %c128], %17 {strides = array<i32>} : memref<8x16x160xbf16, #tpu.memory_space<vmem>>, vector<8x14x32xbf16>,
    %c0_17 = arith.constant 0 : index
    %c0_18 = arith.constant 0 : index
    %c0_19 = arith.constant 0 : index
    %19 = vector.load %arg5[%c0_17, %c0_18, %c0_19] : memref<8x16x160xbf16, #tpu.memory_space<vmem>>, vector<8x16x160xbf16>
    %20 = vector.shape_cast %19 : vector<8x16x160xbf16> to vector<128x160xbf16>
    %cst_20 = arith.constant dense<0.000000e+00> : vector<128x256xf32>
    %21 = tpu.matmul %20, %2, %cst_20 {dimension_numbers = #tpu.dot_dimension_numbers<[1], [0], [0], [1], [0, 0, 1, 1], [], []>} : vector<128x160xbf16>, vector<160x256xbf16>, vector<128x256xf32> -> vector<128x256xf32>
    %22 = vector.shape_cast %21 : vector<128x256xf32> to vector<8x16x256xf32>
    %cst_21 = arith.constant dense<0xFF800000> : vector<8x256xf32>
    %23 = vector.multi_reduction <maximumf>, %22, %cst_21 [1] : vector<8x16x256xf32> to vector<8x256xf32>
    %24 = arith.addf %23, %5 : vector<8x256xf32>
    %cst_22 = arith.constant 0.000000e+00 : f32
    %25 = vector.broadcast %cst_22 : f32 to vector<8x256xf32>
    %26 = arith.maximumf %24, %25 : vector<8x256xf32>
    %27 = arith.truncf %26 : vector<8x256xf32> to vector<8x256xbf16>
    %28 = arith.index_cast %7 : i32 to index
    %c0_23 = arith.constant 0 : index
    %29 = vector.load %arg4[%28, %c0_23] : memref<8x256xbf16, #tpu.memory_space<vmem>>, vector<8x256xbf16>
    tpu.vector_store %arg4[%28, %c0_23], %27 {strides = array<i32>} : memref<8x256xbf16, #tpu.memory_space<vmem>>, vector<8x256xbf16>,
    %c1_i32 = arith.constant 1 : i32
    return
  }
  func.func @transform_0(%arg0: i32) -> (i32, i32, i32) {
    %c0_i32 = arith.constant 0 : i32
    %c0_i32_0 = arith.constant 0 : i32
    %c0_i32_1 = arith.constant 0 : i32
    return %arg0, %c0_i32, %c0_i32_0 : i32, i32, i32
  }
  func.func @transform_1(%arg0: i32) -> (i32, i32) {
    %c0_i32 = arith.constant 0 : i32
    %c0_i32_0 = arith.constant 0 : i32
    %c0_i32_1 = arith.constant 0 : i32
    return %c0_i32, %c0_i32_0 : i32, i32
  }
  func.func @transform_2(%arg0: i32) -> (i32, i32) {
    %c0_i32 = arith.constant 0 : i32
    %c0_i32_0 = arith.constant 0 : i32
    %c0_i32_1 = arith.constant 0 : i32
    return %c0_i32, %c0_i32_0 : i32, i32
  }
  func.func @transform_3(%arg0: i32) -> (i32, i32) {
    %c0_i32 = arith.constant 0 : i32
    %c0_i32_0 = arith.constant 0 : i32
    return %arg0, %c0_i32 : i32, i32
  }
}

</mosaic_0001>

<llo_original>
// kernel: tpu_custom_call.1
$region0: #{tpu_custom_call.1}
  #allocation0 [shape = 'u32[]', space=smem, size = 0x4, offset = 0x4, fixed_abs, tag = 'smem constant byte address 0x4 - core index']
  #allocation1 [shape = 'u32[144,128]{1,0:T(1,128)}', space=vmem, size = 0x12000, scoped, tag = 'internal scratch']
  #allocation2 [shape = 'bf16[8,16,160]{2,1,0:T(16,128)(2,1)}', space=vmem, size = 0x10000, scoped, tag = 'scratch operand']
  %s0 = inlined_call_operand.hbm [shape: bf16[16,16,32], index: 0, kind: input, shape index: {}]
  %s1 = inlined_call_operand.hbm [shape: bf16[160,256], index: 1, kind: input, shape index: {}]
  %s2 = inlined_call_operand.vmem [shape: f32[1,256], index: 2, kind: input, shape index: {}]
  %s3 = inlined_call_operand.hbm [shape: bf16[16,256], index: 3, kind: output, shape index: {}]
  %s4 = sld [smem:[#allocation0]]
  $region53: #{tpu_custom_call.1} parent=0
    _
  %s6 = ssub.s32 1, %s4
  %s7 = scalar_select 0, %s6, %s4
  $region1: #{tpu_custom_call.1} parent=0
    #allocation3 [shape = 'u8[65536]{0}', space=vmem, size = 0x10000, scoped, tag = 'input window, operand 0']
    #allocation4 [shape = 's32[2]{0}', space=sflag, size = 0x8, scoped, tag = 'scoped memory for tpu_custom_call.1']
    #allocation5 [shape = 's32[2]{0}', space=sflag, size = 0x8, scoped, tag = 'scoped memory for tpu_custom_call.1']
    #allocation6 [shape = 'u8[81920]{0}', space=vmem, size = 0x14000, scoped, tag = 'input window, operand 1, single buffered']
    #allocation7 [shape = 's32[1]{0}', space=sflag, size = 0x4, scoped, tag = 'scoped memory for tpu_custom_call.1']
    #allocation8 [shape = 'u8[8192]{0}', space=vmem, size = 0x2000, scoped, tag = 'output window, operand 0']
    %8 = vsyncpa [#allocation4], 0
    %s9 = scalar_lea.sflag [#allocation4], 1
    %10 = vsyncpa %s9, 0
    %11 = vsyncpa [#allocation7], 0
    %12 = vsyncpa [#allocation5], 0
    %s13 = scalar_lea.sflag [#allocation5], 1
    %14 = vsyncpa %s13, 0
    loop: start=0, step=1, limit=4
    $region2: #{tpu_custom_call.1} parent=1 // loop_pre_header
      _
    $region3: #{tpu_custom_call.1} parent=1 // loop_header
      %s16 = sphi 0, %s20
      %p17 = scmp.ge.s32.totalorder %s16, 4
      %s26 = sphi 0, %s28
      %s29 = sphi 0, %s26
      %s30 = sphi 0, %s29
      %s46 = sphi 0, %s30
      %s50 = sphi 0, %s50
      %s52 = sphi 0, %s50
      %s53 = sphi 0, %s52
      %s67 = sphi 0, %s53
      %s71 = sphi 0, %s71
      %s73 = sphi 0, %s71
      %s74 = sphi 0, %s73
      %s88 = sphi 0, %s74
      %s94 = sphi 0, %s96
      %s97 = sphi 0, %s94
      %s98 = sphi 0, %s97
      %s114 = sphi 0, %s98
    $region4: #{tpu_custom_call.1} parent=1 // loop_header_branch
      %19 = sbr.rel (%p17) target = $region8
    $region5: #{tpu_custom_call.1} parent=1 // loop_body
      %s21 = ssub.s32 %s16, 1
      %s22 = ssub.s32 %s16, 2
      %s23 = sadd.s32 %s16, 1
      %s24 = ssub.s32 %s16, %s23
      %p25 = scmp.eq.s32.totalorder %s24, 0
      %s27 = sadd.s32 %s26, 1
      %s28 = scalar_select %p25, %s26, %s27
      %p31 = pneg %p25
      %p32 = scmp.eq.s32.totalorder %s16, 1
      %p33 = por %p31, %p32
      %p34 = scmp.ne.s32.totalorder %s26, %s29
      %p35 = scmp.eq.s32.totalorder %s16, 0
      %p36 = por %p34, %p35
      %p37 = scmp.ne.s32.totalorder %s26, %s29
      %p38 = scmp.eq.s32.totalorder %s21, 1
      %p39 = por %p37, %p38
      %p40 = scmp.ne.s32.totalorder %s29, %s30
      %p41 = scmp.eq.s32.totalorder %s21, 0
      %p42 = por %p40, %p41
      %p43 = scmp.ne.s32.totalorder %s29, %s30
      %p44 = scmp.eq.s32.totalorder %s22, 1
      %p45 = por %p43, %p44
      %p47 = scmp.ne.s32.totalorder %s30, %s46
      %p48 = scmp.eq.s32.totalorder %s22, 0
      %p49 = por %p47, %p48
      %s51 = sadd.s32 %s50, 1
      %p54 = scmp.eq.s32.totalorder %s16, 1
      %p55 = scmp.ne.s32.totalorder %s50, %s52
      %p56 = scmp.eq.s32.totalorder %s16, 0
      %p57 = por %p55, %p56
      %p58 = scmp.ne.s32.totalorder %s50, %s52
      %p59 = scmp.eq.s32.totalorder %s21, 1
      %p60 = por %p58, %p59
      %p61 = scmp.ne.s32.totalorder %s52, %s53
      %p62 = scmp.eq.s32.totalorder %s21, 0
      %p63 = por %p61, %p62
      %p64 = scmp.ne.s32.totalorder %s52, %s53
      %p65 = scmp.eq.s32.totalorder %s22, 1
      %p66 = por %p64, %p65
      %p68 = scmp.ne.s32.totalorder %s53, %s67
      %p69 = scmp.eq.s32.totalorder %s22, 0
      %p70 = por %p68, %p69
      %s72 = sadd.s32 %s71, 1
      %p75 = scmp.eq.s32.totalorder %s16, 1
      %p76 = scmp.ne.s32.totalorder %s71, %s73
      %p77 = scmp.eq.s32.totalorder %s16, 0
      %p78 = por %p76, %p77
      %p79 = scmp.ne.s32.totalorder %s71, %s73
      %p80 = scmp.eq.s32.totalorder %s21, 1
      %p81 = por %p79, %p80
      %p82 = scmp.ne.s32.totalorder %s73, %s74
      %p83 = scmp.eq.s32.totalorder %s21, 0
      %p84 = por %p82, %p83
      %p85 = scmp.ne.s32.totalorder %s73, %s74
      %p86 = scmp.eq.s32.totalorder %s22, 1
      %p87 = por %p85, %p86
      %p89 = scmp.ne.s32.totalorder %s74, %s88
      %p90 = scmp.eq.s32.totalorder %s22, 0
      %p91 = por %p89, %p90
      %s92 = ssub.s32 %s16, %s23
      %p93 = scmp.eq.s32.totalorder %s92, 0
      %s95 = sadd.s32 %s94, 1
      %s96 = scalar_select %p93, %s94, %s95
      %p99 = pneg %p93
      %p100 = scmp.eq.s32.totalorder %s16, 1
      %p101 = por %p99, %p100
      %p102 = scmp.ne.s32.totalorder %s94, %s97
      %p103 = scmp.eq.s32.totalorder %s16, 0
      %p104 = por %p102, %p103
      %p105 = scmp.ne.s32.totalorder %s94, %s97
      %p106 = scmp.eq.s32.totalorder %s21, 1
      %p107 = por %p105, %p106
      %p108 = scmp.ne.s32.totalorder %s97, %s98
      %p109 = scmp.eq.s32.totalorder %s21, 0
      %p110 = por %p108, %p109
      %p111 = scmp.ne.s32.totalorder %s97, %s98
      %p112 = scmp.eq.s32.totalorder %s22, 1
      %p113 = por %p111, %p112
      %p115 = scmp.ne.s32.totalorder %s98, %s114
      %p116 = scmp.eq.s32.totalorder %s22, 0
      %p117 = por %p115, %p116
      %p118 = scmp.le.s32.totalorder 1, %s16
      %p119 = scmp.lt.s32.totalorder %s16, 3
      %p120 = pnand %p118, %p119
      %p121 = pneg %p120
      // Predicated region
      $region9: #{tpu_custom_call.1} parent=5 // pred_check
        _
      $region10: #{tpu_custom_call.1} parent=5 // pred_check_branch
        %123 = sbr.rel (%p120) target = $region12
      $region11: #{tpu_custom_call.1} parent=5 // pred_region
        %s124 = ssub.s32 %s16, 1
        // Predicated region
        $region13: #{tpu_custom_call.1} parent=11 // pred_check
          %p125 = pneg %p63
        $region14: #{tpu_custom_call.1} parent=11 // pred_check_branch
          %127 = sbr.rel (%p125) target = $region16
        $region15: #{tpu_custom_call.1} parent=11 // pred_region
          %s129 = ssub.s32 2560, 2560
          %130 = vsyncadd [#allocation7], %s129
          %s131 = sshll.u32 [#allocation6], 4
          %s132 = int_to_ptr.vmem [resolvable:$true] %s131
          %137 = dma.hbm_to_vmem [thread:$0]  %s1, 2560, %s132, [#allocation7], 128, 128, 8
        $region16: #{tpu_custom_call.1} parent=11 // pred_fallthru
          _
        // Predicated region
        $region17: #{tpu_custom_call.1} parent=11 // pred_check
          %p138 = pneg %p84
        $region18: #{tpu_custom_call.1} parent=11 // pred_check_branch
          %140 = sbr.rel (%p138) target = $region20
        $region19: #{tpu_custom_call.1} parent=11 // pred_region
          _
        $region20: #{tpu_custom_call.1} parent=11 // pred_fallthru
          _
      $region12: #{tpu_custom_call.1} parent=5 // pred_fallthru
        _
      %p141 = scmp.lt.s32.totalorder %s16, 2
      // Predicated region
      $region21: #{tpu_custom_call.1} parent=5 // pred_check
        %p142 = pneg %p141
      $region22: #{tpu_custom_call.1} parent=5 // pred_check_branch
        %144 = sbr.rel (%p142) target = $region24
      $region23: #{tpu_custom_call.1} parent=5 // pred_region
        // Predicated region
        $region25: #{tpu_custom_call.1} parent=23 // pred_check
          %p145 = pneg %p36
        $region26: #{tpu_custom_call.1} parent=23 // pred_check_branch
          %147 = sbr.rel (%p145) target = $region28
        $region27: #{tpu_custom_call.1} parent=23 // pred_region
          %s148 = sand.u32 %s26, 1
          %s149 = scalar_lea.sflag [#allocation4], %s148
          %s150 = sand.u32 %s26, 1
          %s151 = smul.addr %s150, 64
          %s152 = scalar_lea.vmem [#allocation3], %s151
          %s153 = smul.u32 8, %s16
          %s155 = ssub.s32 1024, 1024
          %156 = vsyncadd %s149, %s155
          %s157 = smul.addr %s153, 2
          %s158 = smul.addr %s157, 64
          %s159 = scalar_lea.hbm %s0, %s158
          %s160 = sshll.u32 %s152, 4
          %s161 = int_to_ptr.vmem [resolvable:$true] %s160
          %166 = dma.hbm_to_vmem [thread:$0]  %s159, 1024, %s161, %s149, 64, 64, 4
        $region28: #{tpu_custom_call.1} parent=23 // pred_fallthru
          _
      $region24: #{tpu_custom_call.1} parent=5 // pred_fallthru
        _
      %p167 = scmp.le.s32.totalorder 1, %s16
      %p168 = scmp.lt.s32.totalorder %s16, 3
      %p169 = pnand %p167, %p168
      %p170 = pneg %p169
      // Predicated region
      $region29: #{tpu_custom_call.1} parent=5 // pred_check
        _
      $region30: #{tpu_custom_call.1} parent=5 // pred_check_branch
        %172 = sbr.rel (%p169) target = $region32
      $region31: #{tpu_custom_call.1} parent=5 // pred_region
        %s173 = ssub.s32 %s16, 1
        %s174 = sand.u32 %s29, 1
        %s175 = scalar_lea.sflag [#allocation4], %s174
        %s176 = sand.u32 %s29, 1
        %s177 = smul.addr %s176, 64
        %s178 = scalar_lea.vmem [#allocation3], %s177
        // Predicated region
        $region33: #{tpu_custom_call.1} parent=31 // pred_check
          %p179 = pneg %p42
        $region34: #{tpu_custom_call.1} parent=31 // pred_check_branch
          %181 = sbr.rel (%p179) target = $region36
        $region35: #{tpu_custom_call.1} parent=31 // pred_region
          %182 = dma.done %s175, 1024
        $region36: #{tpu_custom_call.1} parent=31 // pred_fallthru
          _
        // Predicated region
        $region37: #{tpu_custom_call.1} parent=31 // pred_check
          %p183 = pneg %p63
        $region38: #{tpu_custom_call.1} parent=31 // pred_check_branch
          %185 = sbr.rel (%p183) target = $region40
        $region39: #{tpu_custom_call.1} parent=31 // pred_region
          %186 = dma.done [#allocation7], 2560
        $region40: #{tpu_custom_call.1} parent=31 // pred_fallthru
          _
        %s187 = sand.u32 %s29, 1
        %s188 = scalar_lea.sflag [#allocation4], %s187
        %s189 = sand.u32 %s29, 1
        %s190 = smul.addr %s189, 64
        %s191 = scalar_lea.vmem [#allocation3], %s190
        %p192 = pneg %p42
        %p193 = pneg %p39
        %p194 = pneg %p63
        %p195 = pneg %p60
        %p196 = pneg %p84
        %p197 = pneg %p81
        %p198 = pneg %p110
        %p199 = pneg %p107
        %s200 = sand.u32 %s97, 1
        %s201 = scalar_lea.sflag [#allocation5], %s200
        %s202 = sand.u32 %s97, 1
        %s203 = smul.addr %s202, 8
        %s204 = scalar_lea.vmem [#allocation8], %s203
        %s205 = smul.u32 8, %s21
        %207 = vst [vmem:[#allocation2] sm:$0xff] 0
        %vm208 = vcmask 261120
        %209 = vst.msk [vmem:[#allocation2 + $0x8] sm:$0xff] %vm208, 0
        %210 = vst [vmem:[#allocation2 + $0x10] sm:$0xff] 0
        %211 = vst.msk [vmem:[#allocation2 + $0x18] sm:$0xff] %vm208, 0
        %212 = vst [vmem:[#allocation2 + $0x20] sm:$0xff] 0
        %213 = vst.msk [vmem:[#allocation2 + $0x28] sm:$0xff] %vm208, 0
        %214 = vst [vmem:[#allocation2 + $0x30] sm:$0xff] 0
        %215 = vst.msk [vmem:[#allocation2 + $0x38] sm:$0xff] %vm208, 0
        %216 = vst [vmem:[#allocation2 + $0x40] sm:$0xff] 0
        %217 = vst.msk [vmem:[#allocation2 + $0x48] sm:$0xff] %vm208, 0
        %218 = vst [vmem:[#allocation2 + $0x50] sm:$0xff] 0
        %219 = vst.msk [vmem:[#allocation2 + $0x58] sm:$0xff] %vm208, 0
        %220 = vst [vmem:[#allocation2 + $0x60] sm:$0xff] 0
        %221 = vst.msk [vmem:[#allocation2 + $0x68] sm:$0xff] %vm208, 0
        %222 = vst [vmem:[#allocation2 + $0x70] sm:$0xff] 0
        %223 = vst.msk [vmem:[#allocation2 + $0x78] sm:$0xff] %vm208, 0
        %v224 = vld [vmem:[#allocation6] sm:$0xff]
        %v225 = vld [vmem:[#allocation6 + $0x8] sm:$0xff]
        %v226 = vld [vmem:[#allocation6 + $0x10] sm:$0xff]
        %v227 = vld [vmem:[#allocation6 + $0x18] sm:$0xff]
        %v228 = vld [vmem:[#allocation6 + $0x20] sm:$0xff]
        %v229 = vld [vmem:[#allocation6 + $0x28] sm:$0xff]
        %v230 = vld [vmem:[#allocation6 + $0x30] sm:$0xff]
        %v231 = vld [vmem:[#allocation6 + $0x38] sm:$0xff]
        %v232 = vld [vmem:[#allocation6 + $0x40] sm:$0xff]
        %v233 = vld [vmem:[#allocation6 + $0x48] sm:$0xff]
        %v234 = vld [vmem:[#allocation6 + $0x50] sm:$0xff]
        %v235 = vld [vmem:[#allocation6 + $0x58] sm:$0xff]
        %v236 = vld [vmem:[#allocation6 + $0x60] sm:$0xff]
        %v237 = vld [vmem:[#allocation6 + $0x68] sm:$0xff]
        %v238 = vld [vmem:[#allocation6 + $0x70] sm:$0xff]
        %v239 = vld [vmem:[#allocation6 + $0x78] sm:$0xff]
        %v240 = vld [vmem:[#allocation6 + $0x80] sm:$0xff]
        %v241 = vld [vmem:[#allocation6 + $0x88] sm:$0xff]
        %v242 = vld [vmem:[#allocation6 + $0x90] sm:$0xff]
        %v243 = vld [vmem:[#allocation6 + $0x98] sm:$0xff]
        %v244 = vld [vmem:[%s2] sm:$0x3]
        %v246 = vlaneseq
        %v247 = vshrl.u32 %v246, 7
        %v248 = vsub.s32 0, %v247
        %v249 = vrot.slane %v244, %v248
        %v250 = vlaneseq
        %v251 = vshrl.u32 %v250, 7
        %v252 = vsub.s32 1, %v251
        %v253 = vrot.slane %v244, %v252
        %s256 = smul.u32 0, 2
        %s257 = smul.addr %s256, 4
        %s258 = scalar_lea.vmem %s178, %s257 [#allocation3]
        %v259 = vld [vmem:[%s258] sm:$0xf]
        %v260 = vld [vmem:[%s258 + $0x4] sm:$0xf]
        %v261 = vld [vmem:[%s258 + $0x8] sm:$0xf]
        %v262 = vld [vmem:[%s258 + $0xc] sm:$0xf]
        %v263 = vld [vmem:[%s258 + $0x10] sm:$0xf]
        %v264 = vld [vmem:[%s258 + $0x14] sm:$0xf]
        %v265 = vld [vmem:[%s258 + $0x18] sm:$0xf]
        %v266 = vld [vmem:[%s258 + $0x1c] sm:$0xf]
        %v267 = vld [vmem:[%s258 + $0x20] sm:$0xf]
        %v268 = vld [vmem:[%s258 + $0x24] sm:$0xf]
        %v269 = vld [vmem:[%s258 + $0x28] sm:$0xf]
        %v270 = vld [vmem:[%s258 + $0x2c] sm:$0xf]
        %v271 = vld [vmem:[%s258 + $0x30] sm:$0xf]
        %v272 = vld [vmem:[%s258 + $0x34] sm:$0xf]
        %v273 = vld [vmem:[%s258 + $0x38] sm:$0xf]
        %v274 = vld [vmem:[%s258 + $0x3c] sm:$0xf]
        %v291 = vunpack.c.l.b16 %v259
        %v292 = vunpack.c.l.b16 %v260
        %v293 = vunpack.c.l.b16 %v261
        %v294 = vunpack.c.l.b16 %v262
        %v295 = vunpack.c.l.b16 %v263
        %v296 = vunpack.c.l.b16 %v264
        %v297 = vunpack.c.l.b16 %v265
        %v298 = vunpack.c.l.b16 %v266
        %v299 = vunpack.c.l.b16 %v267
        %v300 = vunpack.c.l.b16 %v268
        %v301 = vunpack.c.l.b16 %v269
        %v302 = vunpack.c.l.b16 %v270
        %v303 = vunpack.c.l.b16 %v271
        %v304 = vunpack.c.l.b16 %v272
        %v305 = vunpack.c.l.b16 %v273
        %v306 = vunpack.c.l.b16 %v274
        %v307 = vpack.c.b16 %v292, %v291
        %v308 = vpack.c.b16 %v294, %v293
        %v309 = vpack.c.b16 %v296, %v295
        %v310 = vpack.c.b16 %v298, %v297
        %v311 = vpack.c.b16 %v300, %v299
        %v312 = vpack.c.b16 %v302, %v301
        %v313 = vpack.c.b16 %v304, %v303
        %v314 = vpack.c.b16 %v306, %v305
        %v315 = vrot.slane %v307, 7
        %v316 = vrot.slane %v308, 7
        %v317 = vrot.slane %v309, 7
        %v318 = vrot.slane %v310, 7
        %v319 = vrot.slane %v311, 7
        %v320 = vrot.slane %v312, 7
        %v321 = vrot.slane %v313, 7
        %v322 = vrot.slane %v314, 7
        %vm331 = vcmask 261121
        %332 = vst.msk [vmem:[#allocation2] sm:$0xfe] %vm331, %v315
        %333 = vst.msk [vmem:[#allocation2 + $0x10] sm:$0xfe] %vm331, %v316
        %334 = vst.msk [vmem:[#allocation2 + $0x20] sm:$0xfe] %vm331, %v317
        %335 = vst.msk [vmem:[#allocation2 + $0x30] sm:$0xfe] %vm331, %v318
        %336 = vst.msk [vmem:[#allocation2 + $0x40] sm:$0xfe] %vm331, %v319
        %337 = vst.msk [vmem:[#allocation2 + $0x50] sm:$0xfe] %vm331, %v320
        %338 = vst.msk [vmem:[#allocation2 + $0x60] sm:$0xfe] %vm331, %v321
        %339 = vst.msk [vmem:[#allocation2 + $0x70] sm:$0xfe] %vm331, %v322
        %v341 = vshrl.u32 %v307, 16
        %v343 = vrot.slane %v341, 7
        %v344 = vshll.u32 %v307, 16
        %v346 = vor.u32 %v343, %v344
        %v348 = vshrl.u32 %v308, 16
        %v350 = vrot.slane %v348, 7
        %v351 = vshll.u32 %v308, 16
        %v353 = vor.u32 %v350, %v351
        %v355 = vshrl.u32 %v309, 16
        %v357 = vrot.slane %v355, 7
        %v358 = vshll.u32 %v309, 16
        %v360 = vor.u32 %v357, %v358
        %v362 = vshrl.u32 %v310, 16
        %v364 = vrot.slane %v362, 7
        %v365 = vshll.u32 %v310, 16
        %v367 = vor.u32 %v364, %v365
        %v369 = vshrl.u32 %v311, 16
        %v371 = vrot.slane %v369, 7
        %v372 = vshll.u32 %v311, 16
        %v374 = vor.u32 %v371, %v372
        %v376 = vshrl.u32 %v312, 16
        %v378 = vrot.slane %v376, 7
        %v379 = vshll.u32 %v312, 16
        %v381 = vor.u32 %v378, %v379
        %v383 = vshrl.u32 %v313, 16
        %v385 = vrot.slane %v383, 7
        %v386 = vshll.u32 %v313, 16
        %v388 = vor.u32 %v385, %v386
        %v390 = vshrl.u32 %v314, 16
        %v392 = vrot.slane %v390, 7
        %v393 = vshll.u32 %v314, 16
        %v395 = vor.u32 %v392, %v393
        %396 = vrot.lane.b32.xlu0 %v346, 32
        %v397 = vpop.permute.xlu0 %396
        %398 = vrot.lane.b32.xlu0 %v353, 32
        %v399 = vpop.permute.xlu0 %398
        %400 = vrot.lane.b32.xlu0 %v360, 32
        %v401 = vpop.permute.xlu0 %400
        %402 = vrot.lane.b32.xlu0 %v367, 32
        %v403 = vpop.permute.xlu0 %402
        %404 = vrot.lane.b32.xlu0 %v374, 32
        %v405 = vpop.permute.xlu0 %404
        %406 = vrot.lane.b32.xlu0 %v381, 32
        %v407 = vpop.permute.xlu0 %406
        %408 = vrot.lane.b32.xlu0 %v388, 32
        %v409 = vpop.permute.xlu0 %408
        %410 = vrot.lane.b32.xlu0 %v395, 32
        %v411 = vpop.permute.xlu0 %410
        %vm420 = vcmask 523520
        %vm421 = vsmask.f32 7938
        %vm422 = vmand %vm420, %vm421
        %v423 = vld [vmem:[#allocation2] sm:$0xff]
        %v424 = vsel %vm422, %v397, %v423
        %425 = vst [vmem:[#allocation2] sm:$0xff] %v424
        %v426 = vld [vmem:[#allocation2 + $0x10] sm:$0xff]
        %v427 = vsel %vm422, %v399, %v426
        %428 = vst [vmem:[#allocation2 + $0x10] sm:$0xff] %v427
        %v429 = vld [vmem:[#allocation2 + $0x20] sm:$0xff]
        %v430 = vsel %vm422, %v401, %v429
        %431 = vst [vmem:[#allocation2 + $0x20] sm:$0xff] %v430
        %v432 = vld [vmem:[#allocation2 + $0x30] sm:$0xff]
        %v433 = vsel %vm422, %v403, %v432
        %434 = vst [vmem:[#allocation2 + $0x30] sm:$0xff] %v433
        %v435 = vld [vmem:[#allocation2 + $0x40] sm:$0xff]
        %v436 = vsel %vm422, %v405, %v435
        %437 = vst [vmem:[#allocation2 + $0x40] sm:$0xff] %v436
        %v438 = vld [vmem:[#allocation2 + $0x50] sm:$0xff]
        %v439 = vsel %vm422, %v407, %v438
        %440 = vst [vmem:[#allocation2 + $0x50] sm:$0xff] %v439
        %v441 = vld [vmem:[#allocation2 + $0x60] sm:$0xff]
        %v442 = vsel %vm422, %v409, %v441
        %443 = vst [vmem:[#allocation2 + $0x60] sm:$0xff] %v442
        %v444 = vld [vmem:[#allocation2 + $0x70] sm:$0xff]
        %v445 = vsel %vm422, %v411, %v444
        %446 = vst [vmem:[#allocation2 + $0x70] sm:$0xff] %v445
        %447 = vrot.lane.b32.xlu0 %v307, 64
        %v448 = vpop.permute.xlu0 %447
        %449 = vrot.lane.b32.xlu0 %v308, 64
        %v450 = vpop.permute.xlu0 %449
        %451 = vrot.lane.b32.xlu0 %v309, 64
        %v452 = vpop.permute.xlu0 %451
        %453 = vrot.lane.b32.xlu0 %v310, 64
        %v454 = vpop.permute.xlu0 %453
        %455 = vrot.lane.b32.xlu0 %v311, 64
        %v456 = vpop.permute.xlu0 %455
        %457 = vrot.lane.b32.xlu0 %v312, 64
        %v458 = vpop.permute.xlu0 %457
        %459 = vrot.lane.b32.xlu0 %v313, 64
        %v460 = vpop.permute.xlu0 %459
        %461 = vrot.lane.b32.xlu0 %v314, 64
        %v462 = vpop.permute.xlu0 %461
        %vm471 = vcmask 785920
        %472 = vst.msk [vmem:[#allocation2] sm:$0xff] %vm471, %v448
        %473 = vst.msk [vmem:[#allocation2 + $0x10] sm:$0xff] %vm471, %v450
        %474 = vst.msk [vmem:[#allocation2 + $0x20] sm:$0xff] %vm471, %v452
        %475 = vst.msk [vmem:[#allocation2 + $0x30] sm:$0xff] %vm471, %v454
        %476 = vst.msk [vmem:[#allocation2 + $0x40] sm:$0xff] %vm471, %v456
        %477 = vst.msk [vmem:[#allocation2 + $0x50] sm:$0xff] %vm471, %v458
        %478 = vst.msk [vmem:[#allocation2 + $0x60] sm:$0xff] %vm471, %v460
        %479 = vst.msk [vmem:[#allocation2 + $0x70] sm:$0xff] %vm471, %v462
        %v480 = vrot.slane %v344, 1
        %v481 = vor.u32 %v341, %v480
        %v482 = vrot.slane %v351, 1
        %v483 = vor.u32 %v348, %v482
        %v484 = vrot.slane %v358, 1
        %v485 = vor.u32 %v355, %v484
        %v486 = vrot.slane %v365, 1
        %v487 = vor.u32 %v362, %v486
        %v488 = vrot.slane %v372, 1
        %v489 = vor.u32 %v369, %v488
        %v490 = vrot.slane %v379, 1
        %v491 = vor.u32 %v376, %v490
        %v492 = vrot.slane %v386, 1
        %v493 = vor.u32 %v383, %v492
        %v494 = vrot.slane %v393, 1
        %v495 = vor.u32 %v390, %v494
        %496 = vrot.lane.b32.xlu0 %v481, 96
        %v497 = vpop.permute.xlu0 %496
        %498 = vrot.lane.b32.xlu0 %v483, 96
        %v499 = vpop.permute.xlu0 %498
        %500 = vrot.lane.b32.xlu0 %v485, 96
        %v501 = vpop.permute.xlu0 %500
        %502 = vrot.lane.b32.xlu0 %v487, 96
        %v503 = vpop.permute.xlu0 %502
        %504 = vrot.lane.b32.xlu0 %v489, 96
        %v505 = vpop.permute.xlu0 %504
        %506 = vrot.lane.b32.xlu0 %v491, 96
        %v507 = vpop.permute.xlu0 %506
        %508 = vrot.lane.b32.xlu0 %v493, 96
        %v509 = vpop.permute.xlu0 %508
        %510 = vrot.lane.b32.xlu0 %v495, 96
        %v511 = vpop.permute.xlu0 %510
        %vm520 = vcmask 1048320
        %vm521 = vsmask.f32 7424
        %vm522 = vmand %vm520, %vm521
        %v523 = vld [vmem:[#allocation2] sm:$0xff]
        %v524 = vsel %vm522, %v497, %v523
        %525 = vst [vmem:[#allocation2] sm:$0xff] %v524
        %v526 = vld [vmem:[#allocation2 + $0x10] sm:$0xff]
        %v527 = vsel %vm522, %v499, %v526
        %528 = vst [vmem:[#allocation2 + $0x10] sm:$0xff] %v527
        %v529 = vld [vmem:[#allocation2 + $0x20] sm:$0xff]
        %v530 = vsel %vm522, %v501, %v529
        %531 = vst [vmem:[#allocation2 + $0x20] sm:$0xff] %v530
        %v532 = vld [vmem:[#allocation2 + $0x30] sm:$0xff]
        %v533 = vsel %vm522, %v503, %v532
        %534 = vst [vmem:[#allocation2 + $0x30] sm:$0xff] %v533
        %v535 = vld [vmem:[#allocation2 + $0x40] sm:$0xff]
        %v536 = vsel %vm522, %v505, %v535
        %537 = vst [vmem:[#allocation2 + $0x40] sm:$0xff] %v536
        %v538 = vld [vmem:[#allocation2 + $0x50] sm:$0xff]
        %v539 = vsel %vm522, %v507, %v538
        %540 = vst [vmem:[#allocation2 + $0x50] sm:$0xff] %v539
        %v541 = vld [vmem:[#allocation2 + $0x60] sm:$0xff]
        %v542 = vsel %vm522, %v509, %v541
        %543 = vst [vmem:[#allocation2 + $0x60] sm:$0xff] %v542
        %v544 = vld [vmem:[#allocation2 + $0x70] sm:$0xff]
        %v545 = vsel %vm522, %v511, %v544
        %546 = vst [vmem:[#allocation2 + $0x70] sm:$0xff] %v545
        %v547 = vrot.slane %v307, 1
        %v548 = vrot.slane %v308, 1
        %v549 = vrot.slane %v309, 1
        %v550 = vrot.slane %v310, 1
        %v551 = vrot.slane %v311, 1
        %v552 = vrot.slane %v312, 1
        %v553 = vrot.slane %v313, 1
        %v554 = vrot.slane %v314, 1
        %vm563 = vcmask 260096
        %564 = vst.msk [vmem:[#allocation2 + $0x8] sm:$0x7f] %vm563, %v547
        %565 = vst.msk [vmem:[#allocation2 + $0x18] sm:$0x7f] %vm563, %v548
        %566 = vst.msk [vmem:[#allocation2 + $0x28] sm:$0x7f] %vm563, %v549
        %567 = vst.msk [vmem:[#allocation2 + $0x38] sm:$0x7f] %vm563, %v550
        %568 = vst.msk [vmem:[#allocation2 + $0x48] sm:$0x7f] %vm563, %v551
        %569 = vst.msk [vmem:[#allocation2 + $0x58] sm:$0x7f] %vm563, %v552
        %570 = vst.msk [vmem:[#allocation2 + $0x68] sm:$0x7f] %vm563, %v553
        %571 = vst.msk [vmem:[#allocation2 + $0x78] sm:$0x7f] %vm563, %v554
        %v572 = vld [vmem:[#allocation2] sm:$0xff]
        %v573 = vld [vmem:[#allocation2 + $0x8] sm:$0xff]
        %v574 = vld [vmem:[#allocation2 + $0x10] sm:$0xff]
        %v575 = vld [vmem:[#allocation2 + $0x18] sm:$0xff]
        %v576 = vld [vmem:[#allocation2 + $0x20] sm:$0xff]
        %v577 = vld [vmem:[#allocation2 + $0x28] sm:$0xff]
        %v578 = vld [vmem:[#allocation2 + $0x30] sm:$0xff]
        %v579 = vld [vmem:[#allocation2 + $0x38] sm:$0xff]
        %v580 = vld [vmem:[#allocation2 + $0x40] sm:$0xff]
        %v581 = vld [vmem:[#allocation2 + $0x48] sm:$0xff]
        %v582 = vld [vmem:[#allocation2 + $0x50] sm:$0xff]
        %v583 = vld [vmem:[#allocation2 + $0x58] sm:$0xff]
        %v584 = vld [vmem:[#allocation2 + $0x60] sm:$0xff]
        %v585 = vld [vmem:[#allocation2 + $0x68] sm:$0xff]
        %v586 = vld [vmem:[#allocation2 + $0x70] sm:$0xff]
        %v587 = vld [vmem:[#allocation2 + $0x78] sm:$0xff]
        %v608 = vunpack.c.l.b16 %v224
        %v609 = vunpack.c.h.b16 %v224
        %v610 = vunpack.c.l.b16 %v225
        %v611 = vunpack.c.h.b16 %v225
        %v612 = vunpack.c.l.b16 %v226
        %v613 = vunpack.c.h.b16 %v226
        %v614 = vunpack.c.l.b16 %v227
        %v615 = vunpack.c.h.b16 %v227
        %v616 = vunpack.c.l.b16 %v228
        %v617 = vunpack.c.h.b16 %v228
        %v618 = vunpack.c.l.b16 %v229
        %v619 = vunpack.c.h.b16 %v229
        %v620 = vunpack.c.l.b16 %v230
        %v621 = vunpack.c.h.b16 %v230
        %v622 = vunpack.c.l.b16 %v231
        %v623 = vunpack.c.h.b16 %v231
        %v624 = vunpack.c.l.b16 %v232
        %v625 = vunpack.c.h.b16 %v232
        %v626 = vunpack.c.l.b16 %v233
        %v627 = vunpack.c.h.b16 %v233
        %v628 = vunpack.c.l.b16 %v234
        %v629 = vunpack.c.h.b16 %v234
        %v630 = vunpack.c.l.b16 %v235
        %v631 = vunpack.c.h.b16 %v235
        %v632 = vunpack.c.l.b16 %v236
        %v633 = vunpack.c.h.b16 %v236
        %v634 = vunpack.c.l.b16 %v237
        %v635 = vunpack.c.h.b16 %v237
        %v636 = vunpack.c.l.b16 %v238
        %v637 = vunpack.c.h.b16 %v238
        %v638 = vunpack.c.l.b16 %v239
        %v639 = vunpack.c.h.b16 %v239
        %v640 = vunpack.c.l.b16 %v240
        %v641 = vunpack.c.h.b16 %v240
        %v642 = vunpack.c.l.b16 %v241
        %v643 = vunpack.c.h.b16 %v241
        %v644 = vunpack.c.l.b16 %v242
        %v645 = vunpack.c.h.b16 %v242
        %v646 = vunpack.c.l.b16 %v243
        %v647 = vunpack.c.h.b16 %v243
        %v648 = vpack.c.b16 %v610, %v608
        %v649 = vpack.c.b16 %v611, %v609
        %v650 = vpack.c.b16 %v614, %v612
        %v651 = vpack.c.b16 %v615, %v613
        %v652 = vpack.c.b16 %v618, %v616
        %v653 = vpack.c.b16 %v619, %v617
        %v654 = vpack.c.b16 %v622, %v620
        %v655 = vpack.c.b16 %v623, %v621
        %v656 = vpack.c.b16 %v626, %v624
        %v657 = vpack.c.b16 %v627, %v625
        %v658 = vpack.c.b16 %v630, %v628
        %v659 = vpack.c.b16 %v631, %v629
        %v660 = vpack.c.b16 %v634, %v632
        %v661 = vpack.c.b16 %v635, %v633
        %v662 = vpack.c.b16 %v638, %v636
        %v663 = vpack.c.b16 %v639, %v637
        %v664 = vpack.c.b16 %v642, %v640
        %v665 = vpack.c.b16 %v643, %v641
        %v666 = vpack.c.b16 %v646, %v644
        %v667 = vpack.c.b16 %v647, %v645
        %v689 = vsel %vm208, %v573, 0
        %v692 = vsel %vm208, %v575, 0
        %v695 = vsel %vm208, %v577, 0
        %v698 = vsel %vm208, %v579, 0
        %v701 = vsel %vm208, %v581, 0
        %v704 = vsel %vm208, %v583, 0
        %v707 = vsel %vm208, %v585, 0
        %v710 = vsel %vm208, %v587, 0
        %712 = vmatprep.subr.bf16.mxu0 %v649
        %713 = vmatpush1.bf16.msra.mxu0 %v648
        %714 = vmatprep.subr.bf16.mxu0 %v651
        %715 = vmatpush1.bf16.msra.mxu0 %v650
        %716 = vmatprep.subr.bf16.mxu0 %v653
        %717 = vmatpush1.bf16.msra.mxu0 %v652
        %718 = vmatprep.subr.bf16.mxu0 %v655
        %719 = vmatpush1.bf16.msra.mxu0 %v654
        %720 = vmatprep.subr.bf16.mxu0 %v657
        %721 = vmatpush1.bf16.msra.mxu0 %v656
        %722 = vmatprep.subr.bf16.mxu0 %v659
        %723 = vmatpush1.bf16.msra.mxu0 %v658
        %724 = vmatprep.subr.bf16.mxu0 %v661
        %725 = vmatpush1.bf16.msra.mxu0 %v660
        %726 = vmatprep.subr.bf16.mxu0 %v663
        %727 = vmatpush1.bf16.msra.mxu0 %v662
        %728 = vmatprep.subr.bf16.mxu0 %v665
        %729 = vmatpush1.bf16.msra.mxu0 %v664
        %730 = vmatprep.subr.bf16.mxu0 %v667
        %731 = vmatpush1.bf16.msra.mxu0 %v666
        %732 = vmatprep.subr.bf16.mxu0 0
        %733 = vmatpush1.bf16.msra.mxu0 0
        %734 = vmatprep.subr.bf16.mxu0 0
        %735 = vmatpush1.bf16.msra.mxu0 0
        %736 = vmatprep.subr.bf16.mxu0 0
        %737 = vmatpush1.bf16.msra.mxu0 0
        %738 = vmatprep.subr.bf16.mxu0 0
        %739 = vmatpush1.bf16.msra.mxu0 0
        %740 = vmatprep.subr.bf16.mxu0 0
        %741 = vmatpush1.bf16.msra.mxu0 0
        %742 = vmatprep.subr.bf16.mxu0 0
        %743 = vmatpush1.bf16.msra.mxu0 0
        %744 = vmatprep.mubr.bf16.mxu0 %v689
        %745 = vmatmul.mubr.bf16.gmra.mrb[0].mxu0 %v572
        %v746 = vpop.f32.mrb[0].mxu0
        %v747 = vadd.f32 0.0, %v746
        %v748 = vpop.f32.mrb[0].mxu0
        %v749 = vadd.f32 0.0, %v748
        %v750 = vpop.f32.mrb[0].mxu0
        %v751 = vadd.f32 0.0, %v750
        %v752 = vpop.f32.mrb[0].mxu0
        %v753 = vadd.f32 0.0, %v752
        %754 = vmatprep.mubr.bf16.mxu0 %v692
        %755 = vmatmul.mubr.bf16.gmra.mrb[0].mxu0 %v574
        %v756 = vpop.f32.mrb[0].mxu0
        %v757 = vadd.f32 0.0, %v756
        %v758 = vpop.f32.mrb[0].mxu0
        %v759 = vadd.f32 0.0, %v758
        %v760 = vpop.f32.mrb[0].mxu0
        %v761 = vadd.f32 0.0, %v760
        %v762 = vpop.f32.mrb[0].mxu0
        %v763 = vadd.f32 0.0, %v762
        %764 = vmatprep.mubr.bf16.mxu0 %v695
        %765 = vmatmul.mubr.bf16.gmra.mrb[0].mxu0 %v576
        %v766 = vpop.f32.mrb[0].mxu0
        %v767 = vadd.f32 0.0, %v766
        %v768 = vpop.f32.mrb[0].mxu0
        %v769 = vadd.f32 0.0, %v768
        %v770 = vpop.f32.mrb[0].mxu0
        %v771 = vadd.f32 0.0, %v770
        %v772 = vpop.f32.mrb[0].mxu0
        %v773 = vadd.f32 0.0, %v772
        %774 = vmatprep.mubr.bf16.mxu0 %v698
        %775 = vmatmul.mubr.bf16.gmra.mrb[0].mxu0 %v578
        %v776 = vpop.f32.mrb[0].mxu0
        %v777 = vadd.f32 0.0, %v776
        %v778 = vpop.f32.mrb[0].mxu0
        %v779 = vadd.f32 0.0, %v778
        %v780 = vpop.f32.mrb[0].mxu0
        %v781 = vadd.f32 0.0, %v780
        %v782 = vpop.f32.mrb[0].mxu0
        %v783 = vadd.f32 0.0, %v782
        %784 = vmatprep.mubr.bf16.mxu0 %v701
        %785 = vmatmul.mubr.bf16.gmra.mrb[0].mxu0 %v580
        %v786 = vpop.f32.mrb[0].mxu0
        %v787 = vadd.f32 0.0, %v786
        %v788 = vpop.f32.mrb[0].mxu0
        %v789 = vadd.f32 0.0, %v788
        %v790 = vpop.f32.mrb[0].mxu0
        %v791 = vadd.f32 0.0, %v790
        %v792 = vpop.f32.mrb[0].mxu0
        %v793 = vadd.f32 0.0, %v792
        %794 = vmatprep.mubr.bf16.mxu0 %v704
        %795 = vmatmul.mubr.bf16.gmra.mrb[0].mxu0 %v582
        %v796 = vpop.f32.mrb[0].mxu0
        %v797 = vadd.f32 0.0, %v796
        %v798 = vpop.f32.mrb[0].mxu0
        %v799 = vadd.f32 0.0, %v798
        %v800 = vpop.f32.mrb[0].mxu0
        %v801 = vadd.f32 0.0, %v800
        %v802 = vpop.f32.mrb[0].mxu0
        %v803 = vadd.f32 0.0, %v802
        %804 = vmatprep.mubr.bf16.mxu0 %v707
        %805 = vmatmul.mubr.bf16.gmra.mrb[0].mxu0 %v584
        %v806 = vpop.f32.mrb[0].mxu0
        %v807 = vadd.f32 0.0, %v806
        %v808 = vpop.f32.mrb[0].mxu0
        %v809 = vadd.f32 0.0, %v808
        %v810 = vpop.f32.mrb[0].mxu0
        %v811 = vadd.f32 0.0, %v810
        %v812 = vpop.f32.mrb[0].mxu0
        %v813 = vadd.f32 0.0, %v812
        %814 = vmatprep.mubr.bf16.mxu0 %v710
        %815 = vmatmul.mubr.bf16.gmra.mrb[0].mxu0 %v586
        %v816 = vpop.f32.mrb[0].mxu0
        %v817 = vadd.f32 0.0, %v816
        %v818 = vpop.f32.mrb[0].mxu0
        %v819 = vadd.f32 0.0, %v818
        %v820 = vpop.f32.mrb[0].mxu0
        %v821 = vadd.f32 0.0, %v820
        %v822 = vpop.f32.mrb[0].mxu0
        %v823 = vadd.f32 0.0, %v822
        %824 = vdwg.mxu0
        %v825 = vmax.f32 %v747, %v751
        %v826 = vrot.slane %v825, 4
        %v827 = vmax.f32 %v825, %v826
        %v828 = vrot.slane %v827, 2
        %v829 = vmax.f32 %v827, %v828
        %v830 = vrot.slane %v829, 1
        %v831 = vmax.f32 %v829, %v830
        %v832 = vmax.f32 %v749, %v753
        %v833 = vrot.slane %v832, 4
        %v834 = vmax.f32 %v832, %v833
        %v835 = vrot.slane %v834, 2
        %v836 = vmax.f32 %v834, %v835
        %v837 = vrot.slane %v836, 1
        %v838 = vmax.f32 %v836, %v837
        %v839 = vmax.f32 %v757, %v761
        %v840 = vrot.slane %v839, 4
        %v841 = vmax.f32 %v839, %v840
        %v842 = vrot.slane %v841, 2
        %v843 = vmax.f32 %v841, %v842
        %v844 = vrot.slane %v843, 1
        %v845 = vmax.f32 %v843, %v844
        %v846 = vmax.f32 %v759, %v763
        %v847 = vrot.slane %v846, 4
        %v848 = vmax.f32 %v846, %v847
        %v849 = vrot.slane %v848, 2
        %v850 = vmax.f32 %v848, %v849
        %v851 = vrot.slane %v850, 1
        %v852 = vmax.f32 %v850, %v851
        %v853 = vmax.f32 %v767, %v771
        %v854 = vrot.slane %v853, 4
        %v855 = vmax.f32 %v853, %v854
        %v856 = vrot.slane %v855, 2
        %v857 = vmax.f32 %v855, %v856
        %v858 = vrot.slane %v857, 1
        %v859 = vmax.f32 %v857, %v858
        %v860 = vmax.f32 %v769, %v773
        %v861 = vrot.slane %v860, 4
        %v862 = vmax.f32 %v860, %v861
        %v863 = vrot.slane %v862, 2
        %v864 = vmax.f32 %v862, %v863
        %v865 = vrot.slane %v864, 1
        %v866 = vmax.f32 %v864, %v865
        %v867 = vmax.f32 %v777, %v781
        %v868 = vrot.slane %v867, 4
        %v869 = vmax.f32 %v867, %v868
        %v870 = vrot.slane %v869, 2
        %v871 = vmax.f32 %v869, %v870
        %v872 = vrot.slane %v871, 1
        %v873 = vmax.f32 %v871, %v872
        %v874 = vmax.f32 %v779, %v783
        %v875 = vrot.slane %v874, 4
        %v876 = vmax.f32 %v874, %v875
        %v877 = vrot.slane %v876, 2
        %v878 = vmax.f32 %v876, %v877
        %v879 = vrot.slane %v878, 1
        %v880 = vmax.f32 %v878, %v879
        %v881 = vmax.f32 %v787, %v791
        %v882 = vrot.slane %v881, 4
        %v883 = vmax.f32 %v881, %v882
        %v884 = vrot.slane %v883, 2
        %v885 = vmax.f32 %v883, %v884
        %v886 = vrot.slane %v885, 1
        %v887 = vmax.f32 %v885, %v886
        %v888 = vmax.f32 %v789, %v793
        %v889 = vrot.slane %v888, 4
        %v890 = vmax.f32 %v888, %v889
        %v891 = vrot.slane %v890, 2
        %v892 = vmax.f32 %v890, %v891
        %v893 = vrot.slane %v892, 1
        %v894 = vmax.f32 %v892, %v893
        %v895 = vmax.f32 %v797, %v801
        %v896 = vrot.slane %v895, 4
        %v897 = vmax.f32 %v895, %v896
        %v898 = vrot.slane %v897, 2
        %v899 = vmax.f32 %v897, %v898
        %v900 = vrot.slane %v899, 1
        %v901 = vmax.f32 %v899, %v900
        %v902 = vmax.f32 %v799, %v803
        %v903 = vrot.slane %v902, 4
        %v904 = vmax.f32 %v902, %v903
        %v905 = vrot.slane %v904, 2
        %v906 = vmax.f32 %v904, %v905
        %v907 = vrot.slane %v906, 1
        %v908 = vmax.f32 %v906, %v907
        %v909 = vmax.f32 %v807, %v811
        %v910 = vrot.slane %v909, 4
        %v911 = vmax.f32 %v909, %v910
        %v912 = vrot.slane %v911, 2
        %v913 = vmax.f32 %v911, %v912
        %v914 = vrot.slane %v913, 1
        %v915 = vmax.f32 %v913, %v914
        %v916 = vmax.f32 %v809, %v813
        %v917 = vrot.slane %v916, 4
        %v918 = vmax.f32 %v916, %v917
        %v919 = vrot.slane %v918, 2
        %v920 = vmax.f32 %v918, %v919
        %v921 = vrot.slane %v920, 1
        %v922 = vmax.f32 %v920, %v921
        %v923 = vmax.f32 %v817, %v821
        %v924 = vrot.slane %v923, 4
        %v925 = vmax.f32 %v923, %v924
        %v926 = vrot.slane %v925, 2
        %v927 = vmax.f32 %v925, %v926
        %v928 = vrot.slane %v927, 1
        %v929 = vmax.f32 %v927, %v928
        %v930 = vmax.f32 %v819, %v823
        %v931 = vrot.slane %v930, 4
        %v932 = vmax.f32 %v930, %v931
        %v933 = vrot.slane %v932, 2
        %v934 = vmax.f32 %v932, %v933
        %v935 = vrot.slane %v934, 1
        %v936 = vmax.f32 %v934, %v935
        %v937 = vadd.f32 %v831, %v249
        %v938 = vadd.f32 %v838, %v253
        %v939 = vadd.f32 %v845, %v249
        %v940 = vadd.f32 %v852, %v253
        %v941 = vadd.f32 %v859, %v249
        %v942 = vadd.f32 %v866, %v253
        %v943 = vadd.f32 %v873, %v249
        %v944 = vadd.f32 %v880, %v253
        %v945 = vadd.f32 %v887, %v249
        %v946 = vadd.f32 %v894, %v253
        %v947 = vadd.f32 %v901, %v249
        %v948 = vadd.f32 %v908, %v253
        %v949 = vadd.f32 %v915, %v249
        %v950 = vadd.f32 %v922, %v253
        %v951 = vadd.f32 %v929, %v249
        %v952 = vadd.f32 %v936, %v253
        %v953 = vmax.f32 %v937, 0.0
        %v954 = vmax.f32 %v938, 0.0
        %v955 = vmax.f32 %v939, 0.0
        %v956 = vmax.f32 %v940, 0.0
        %v957 = vmax.f32 %v941, 0.0
        %v958 = vmax.f32 %v942, 0.0
        %v959 = vmax.f32 %v943, 0.0
        %v960 = vmax.f32 %v944, 0.0
        %v961 = vmax.f32 %v945, 0.0
        %v962 = vmax.f32 %v946, 0.0
        %v963 = vmax.f32 %v947, 0.0
        %v964 = vmax.f32 %v948, 0.0
        %v965 = vmax.f32 %v949, 0.0
        %v966 = vmax.f32 %v950, 0.0
        %v967 = vmax.f32 %v951, 0.0
        %v968 = vmax.f32 %v952, 0.0
        %v969 = vpack.c.bf16 %v953, %v953
        %v970 = vpack.c.bf16 %v954, %v954
        %v971 = vpack.c.bf16 %v955, %v955
        %v972 = vpack.c.bf16 %v956, %v956
        %v973 = vpack.c.bf16 %v957, %v957
        %v974 = vpack.c.bf16 %v958, %v958
        %v975 = vpack.c.bf16 %v959, %v959
        %v976 = vpack.c.bf16 %v960, %v960
        %v977 = vpack.c.bf16 %v961, %v961
        %v978 = vpack.c.bf16 %v962, %v962
        %v979 = vpack.c.bf16 %v963, %v963
        %v980 = vpack.c.bf16 %v964, %v964
        %v981 = vpack.c.bf16 %v965, %v965
        %v982 = vpack.c.bf16 %v966, %v966
        %v983 = vpack.c.bf16 %v967, %v967
        %v984 = vpack.c.bf16 %v968, %v968
        %v1001 = vunpack.c.l.b16 %v969
        %v1002 = vunpack.c.l.b16 %v970
        %v1003 = vunpack.c.l.b16 %v971
        %v1004 = vunpack.c.l.b16 %v972
        %v1005 = vunpack.c.l.b16 %v973
        %v1006 = vunpack.c.l.b16 %v974
        %v1007 = vunpack.c.l.b16 %v975
        %v1008 = vunpack.c.l.b16 %v976
        %v1009 = vunpack.c.l.b16 %v977
        %v1010 = vunpack.c.l.b16 %v978
        %v1011 = vunpack.c.l.b16 %v979
        %v1012 = vunpack.c.l.b16 %v980
        %v1013 = vunpack.c.l.b16 %v981
        %v1014 = vunpack.c.l.b16 %v982
        %v1015 = vunpack.c.l.b16 %v983
        %v1016 = vunpack.c.l.b16 %v984
        %v1017 = vpack.c.b16 %v1002, %v1001
        %v1018 = vpack.c.b16 %v1004, %v1003
        %v1019 = vpack.c.b16 %v1006, %v1005
        %v1020 = vpack.c.b16 %v1008, %v1007
        %v1021 = vpack.c.b16 %v1010, %v1009
        %v1022 = vpack.c.b16 %v1012, %v1011
        %v1023 = vpack.c.b16 %v1014, %v1013
        %v1024 = vpack.c.b16 %v1016, %v1015
        %v1025 = vunpack.c.l.b16 %v1017
        %v1026 = vunpack.c.h.b16 %v1017
        %v1027 = vunpack.c.l.b16 %v1018
        %v1028 = vunpack.c.h.b16 %v1018
        %v1029 = vunpack.c.l.b16 %v1019
        %v1030 = vunpack.c.h.b16 %v1019
        %v1031 = vunpack.c.l.b16 %v1020
        %v1032 = vunpack.c.h.b16 %v1020
        %v1033 = vunpack.c.l.b16 %v1021
        %v1034 = vunpack.c.h.b16 %v1021
        %v1035 = vunpack.c.l.b16 %v1022
        %v1036 = vunpack.c.h.b16 %v1022
        %v1037 = vunpack.c.l.b16 %v1023
        %v1038 = vunpack.c.h.b16 %v1023
        %v1039 = vunpack.c.l.b16 %v1024
        %v1040 = vunpack.c.h.b16 %v1024
        %v1041 = vrot.slane %v1027, 7
        %vm1042 = vcmask 1041409
        %v1043 = vsel %vm1042, %v1041, %v1025
        %v1044 = vrot.slane %v1029, 6
        %vm1045 = vcmask 1042434
        %v1046 = vsel %vm1045, %v1044, %v1043
        %v1047 = vrot.slane %v1031, 5
        %vm1048 = vcmask 1043459
        %v1049 = vsel %vm1048, %v1047, %v1046
        %v1050 = vrot.slane %v1033, 4
        %vm1051 = vcmask 1044484
        %v1052 = vsel %vm1051, %v1050, %v1049
        %v1053 = vrot.slane %v1035, 3
        %vm1054 = vcmask 1045509
        %v1055 = vsel %vm1054, %v1053, %v1052
        %v1056 = vrot.slane %v1037, 2
        %vm1057 = vcmask 1046534
        %v1058 = vsel %vm1057, %v1056, %v1055
        %v1059 = vrot.slane %v1039, 1
        %vm1060 = vcmask 1047559
        %v1061 = vsel %vm1060, %v1059, %v1058
        %v1062 = vrot.slane %v1028, 7
        %v1063 = vsel %vm1042, %v1062, %v1026
        %v1064 = vrot.slane %v1030, 6
        %v1065 = vsel %vm1045, %v1064, %v1063
        %v1066 = vrot.slane %v1032, 5
        %v1067 = vsel %vm1048, %v1066, %v1065
        %v1068 = vrot.slane %v1034, 4
        %v1069 = vsel %vm1051, %v1068, %v1067
        %v1070 = vrot.slane %v1036, 3
        %v1071 = vsel %vm1054, %v1070, %v1069
        %v1072 = vrot.slane %v1038, 2
        %v1073 = vsel %vm1057, %v1072, %v1071
        %v1074 = vrot.slane %v1040, 1
        %v1075 = vsel %vm1060, %v1074, %v1073
        %v1076 = vpack.c.b16 %v1075, %v1061
        %s1078 = smul.u32 0, 2
        %s1079 = smul.addr %s1078, 4
        %s1080 = scalar_lea.vmem %s204, %s1079 [#allocation8]
        %1081 = vst [vmem:[%s1080] sm:$0xff] %v1076
        %s1082 = sand.u32 %s97, 1
        %s1083 = scalar_lea.sflag [#allocation5], %s1082
        %s1084 = sand.u32 %s97, 1
        %s1085 = smul.addr %s1084, 8
        %s1086 = scalar_lea.vmem [#allocation8], %s1085
        // Predicated region
        $region41: #{tpu_custom_call.1} parent=31 // pred_check
          %p1087 = pneg %p107
        $region42: #{tpu_custom_call.1} parent=31 // pred_check_branch
          %1089 = sbr.rel (%p1087) target = $region44
        $region43: #{tpu_custom_call.1} parent=31 // pred_region
          %s1091 = ssub.s32 128, 128
          %1092 = vsyncadd %s1083, %s1091
          %s1093 = smul.addr %s21, 2
          %s1094 = smul.addr %s1093, 64
          %s1095 = scalar_lea.hbm %s3, %s1094
          %s1097 = sshll.u32 %s1086, 4
          %s1098 = int_to_ptr.vmem [resolvable:$true] %s1097
          %1100 = dma.vmem_to_hbm [thread:$0]  %s1098, 128, %s1095, %s1083
        $region44: #{tpu_custom_call.1} parent=31 // pred_fallthru
          _
      $region32: #{tpu_custom_call.1} parent=5 // pred_fallthru
        _
      %p1101 = scmp.le.s32.totalorder 2, %s16
      // Predicated region
      $region45: #{tpu_custom_call.1} parent=5 // pred_check
        %p1102 = pneg %p1101
      $region46: #{tpu_custom_call.1} parent=5 // pred_check_branch
        %1104 = sbr.rel (%p1102) target = $region48
      $region47: #{tpu_custom_call.1} parent=5 // pred_region
        %s1105 = ssub.s32 %s16, 2
        // Predicated region
        $region49: #{tpu_custom_call.1} parent=47 // pred_check
          %p1106 = pneg %p113
        $region50: #{tpu_custom_call.1} parent=47 // pred_check_branch
          %1108 = sbr.rel (%p1106) target = $region52
        $region51: #{tpu_custom_call.1} parent=47 // pred_region
          %s1109 = sand.u32 %s98, 1
          %s1110 = scalar_lea.sflag [#allocation5], %s1109
          %s1111 = sand.u32 %s98, 1
          %s1112 = smul.addr %s1111, 8
          %s1113 = scalar_lea.vmem [#allocation8], %s1112
          %1114 = dma.done %s1110, 128
        $region52: #{tpu_custom_call.1} parent=47 // pred_fallthru
          _
      $region48: #{tpu_custom_call.1} parent=5 // pred_fallthru
        _
    $region6: #{tpu_custom_call.1} parent=1 // loop_footer
      %s20 = sadd.s32 1, %s16
    $region7: #{tpu_custom_call.1} parent=1 // loop_footer_branch
      %15 = sbr.rel target = $region3
    $region8: #{tpu_custom_call.1} parent=1 // loop_exit
      _
    %1115 = vsyncpa [#allocation4], 1
    %s1116 = scalar_lea.sflag [#allocation4], 1
    %1117 = vsyncpa %s1116, 1
    %1118 = vsyncpa [#allocation7], 1
    %1119 = vsyncpa [#allocation5], 1
    %s1120 = scalar_lea.sflag [#allocation5], 1
    %1121 = vsyncpa %s1120, 1

</llo_original>
